<compile_context>
chip_gen: v7x
topology: tpu7x:2x2x1
jax: 0.10.0
libtpu: 0.0.40
codegen_flags: <defaults>
</compile_context>

<pallas_src>
import functools
import math

import jax
import jax.numpy as jnp
from jax.experimental import pallas as pl
from jax.experimental.pallas import tpu as pltpu

# ----------------------------- small config ---------------------------------
B, C, SEQ = 2, 4, 64          # batch, n_channels, seq_len
PATCH_LEN = 8
STRIDE = 8
N_PATCHES = (max(SEQ, PATCH_LEN) - PATCH_LEN) // STRIDE + 1   # 8
D_MODEL = 32
EPS = 1e-5
_INV_SQRT2 = 1.0 / math.sqrt(2.0)


def _nan_to_num(x):
    """In-kernel torch.nan_to_num(nan=0, posinf=0, neginf=0) (f32)."""
    fmax = jnp.float32(jnp.finfo(jnp.float32).max)
    x = jnp.where(x != x, jnp.float32(0.0), x)        # NaN
    x = jnp.where(x > fmax, jnp.float32(0.0), x)      # +inf
    x = jnp.where(x < -fmax, jnp.float32(0.0), x)     # -inf
    return x


def _revin_norm(x, m):
    """RevIN 'norm' stats for a [rows, S] tile.

    Returns (xn, mean, std) where xn is nan_to_num'ed normalized data.
    Uses rsqrt + multiplies (EUP) instead of divides; one reciprocal of the
    masked count instead of two divides.
    """
    if m is None:
        inv_cnt = jnp.float32(1.0 / (x.shape[-1] + EPS))
        mean = jnp.sum(x, axis=-1, keepdims=True) * inv_cnt
        var = jnp.sum((x - mean) ** 2, axis=-1, keepdims=True) * inv_cnt
    else:
        inv_cnt = 1.0 / (jnp.sum(m, axis=-1, keepdims=True) + EPS)
        mean = jnp.sum(x * m, axis=-1, keepdims=True) * inv_cnt
        var = jnp.sum(m * (x - mean) ** 2, axis=-1, keepdims=True) * inv_cnt
    inv_std = jax.lax.rsqrt(var + EPS)
    std = (var + EPS) * inv_std                       # == sqrt(var + EPS)
    xn = _nan_to_num((x - mean) * inv_std)
    return xn, mean, std


# --------------------------- Pallas kernels ----------------------------------
def _stats_kernel(has_mask, *refs):
    """Pass 1 (only used when the row axis is tiled): per-row max|xn|."""
    if has_mask:
        x_ref, m_ref, amax_ref = refs
        m = m_ref[...]
    else:
        x_ref, amax_ref = refs
        m = None
    xn, _, _ = _revin_norm(x_ref[...], m)
    amax_ref[...] = jnp.max(jnp.abs(xn), axis=-1, keepdims=True)


def _fused_kernel(has_mask, external_scale, *refs):
    """RevIN norm -> scale -> patch embed -> PretrainHead -> denorm, on-chip.

    refs (inputs then output):
      [scale (1,) SMEM  -- only if external_scale]
      x      [TM, S]
      [mask  [TM, S]    -- only if has_mask]
      w_emb  [S, P*D]       f32  block-diagonal patch value-embedding
      b_emb  [1, P*D]       f32
      w_pool [P*D, P]       bf16 per-patch mean pooling (entries 1/D, exact)
      w_bc   [P, P*D]       bf16 per-patch broadcast (entries 1, exact)
      w_head [P*D, S]       f32  block-diagonal PretrainHead linear
      b_head [1, S]         f32
      o      [TM, S]
    """
    idx = 0
    if external_scale:
        scale_ref = refs[idx]; idx += 1
    x_ref = refs[idx]; idx += 1
    if has_mask:
        m_ref = refs[idx]; idx += 1
    we_ref, be_ref, wp_ref, wb_ref, wh_ref, bh_ref, o_ref = refs[idx:]

    x = x_ref[...]
    m = m_ref[...] if has_mask else None

    # ---- RevIN 'norm': per-(batch, channel) stats over seq ----
    xn, mean, std = _revin_norm(x, m)

    # ---- global |max| scale factor (whole batch) ----
    if external_scale:
        scale = scale_ref[0]                                  # scalar from SMEM
    else:
        # single-block path: the tile IS the whole slab, so this max is global
        scale = jnp.max(jnp.max(jnp.abs(xn), axis=-1, keepdims=True),
                        axis=0, keepdims=True) + 1e-5
    inv_scale = 1.0 / scale                                   # one reciprocal
    xs = xn * inv_scale

    # ---- encoder stand-in: per-patch value embedding (block-diag matmul) ----
    h = jnp.dot(xs, we_ref[...], preferred_element_type=jnp.float32) + be_ref[...]
    # clamp applied to enc_out before the head (adapter.pretraining)
    h = jnp.clip(h, -10.0, 10.0)

    # ---- PretrainHead: per-patch standardization over d_model ----
    # factored averaging: pool to [TM, P], broadcast back to [TM, P*D]
    hm = jnp.dot(jnp.dot(h, wp_ref[...], preferred_element_type=jnp.float32),
                 wb_ref[...], preferred_element_type=jnp.float32)
    hc = h - hm
    hv = jnp.dot(jnp.dot(hc * hc, wp_ref[...], preferred_element_type=jnp.float32),
                 wb_ref[...], preferred_element_type=jnp.float32)
    hn = hc * jax.lax.rsqrt(hv + 1e-5)

    # ---- PretrainHead linear + exact GELU + clamp ----
    y = jnp.dot(hn, wh_ref[...], preferred_element_type=jnp.float32) + bh_ref[...]
    y = 0.5 * y * (1.0 + jax.lax.erf(y * _INV_SQRT2))
    y = jnp.clip(y, -10.0, 10.0)

    # ---- un-scale + RevIN 'denorm' + nan_to_num ----
    dec = (y * scale) * std + mean
    o_ref[...] = _nan_to_num(dec)


# ----------------------------- wrappers --------------------------------------
def _row_tile(bc):
    """Row-tile size.  Whole slab in one block when small (scale computed
    in-kernel); otherwise 256-row tiles: 256*64*4B = 64 KiB per buffer, which
    double-buffered plus ~145 KiB of resident weights stays far inside v7x's
    32 MiB scoped-VMEM default (and trivially inside v5e/v6e's 128 MiB)."""
    if bc <= 256:
        return bc
    for t in (256, 128, 64, 32, 16, 8):
        if bc % t == 0:
            return t
    return bc


def _stats_call(x2d, m2d, tm):
    bc, s = x2d.shape
    has_mask = m2d is not None
    row_spec = pl.BlockSpec((tm, s), lambda i: (i, 0))
    in_specs = [row_spec]
    args = [x2d]
    if has_mask:
        in_specs.append(row_spec)
        args.append(m2d)
    return pl.pallas_call(
        functools.partial(_stats_kernel, has_mask),
        grid=(bc // tm,),
        in_specs=in_specs,
        out_specs=pl.BlockSpec((tm, 1), lambda i: (i, 0)),
        out_shape=jax.ShapeDtypeStruct((bc, 1), jnp.float32),
        compiler_params=pltpu.CompilerParams(dimension_semantics=("parallel",)),
    )(*args)


def _main_call(x2d, packed, m2d=None, scale1=None, tm=None):
    bc, s = x2d.shape
    has_mask = m2d is not None
    external_scale = scale1 is not None

    row_spec = pl.BlockSpec((tm, s), lambda i: (i, 0))
    in_specs = []
    args = []
    if external_scale:
        in_specs.append(pl.BlockSpec(memory_space=pltpu.MemorySpace.SMEM))
        args.append(scale1)
    in_specs.append(row_spec)
    args.append(x2d)
    if has_mask:
        in_specs.append(row_spec)
        args.append(m2d)
    # weights: full-array blocks, constant index_map -> resident across grid
    for name in ("w_emb_big", "b_emb_big", "w_pool", "w_bcast",
                 "w_head_big", "b_head_big"):
        w = packed[name]
        in_specs.append(pl.BlockSpec(w.shape, lambda i: (0, 0)))
        args.append(w)

    return pl.pallas_call(
        functools.partial(_fused_kernel, has_mask, external_scale),
        grid=(bc // tm,),
        in_specs=in_specs,
        out_specs=row_spec,
        out_shape=jax.ShapeDtypeStruct((bc, s), jnp.float32),
        compiler_params=pltpu.CompilerParams(dimension_semantics=("parallel",)),
    )(*args)


def tiny_time_mixer_adapter_forward(x_enc, packed, input_mask=None):
    """Pretraining forward.  x_enc: [B, C, SEQ] f32 -> reconstruction [B, C, SEQ].

    mask_generator with mask_ratio=0.0 gives all-ones, so combined_mask is
    just input_mask (or all ones when None -> mask-free kernel path).
    """
    b, c, s = x_enc.shape
    bc = b * c
    x2d = x_enc.reshape(bc, s)                       # metadata-only reshape
    m2d = None
    if input_mask is not None:
        m2d = jnp.broadcast_to(
            input_mask.astype(jnp.float32)[:, None, :], (b, c, s)).reshape(bc, s)

    tm = _row_tile(bc)
    if tm == bc:
        # single block: fully fused, scale computed in-kernel (global by construction)
        out2d = _main_call(x2d, packed, m2d=m2d, tm=tm)
    else:
        # gridded (megacore) path: scale must stay a cross-tile reduction
        amax = _stats_call(x2d, m2d, tm)             # [bc, 1] per-row max|xn|
        scale1 = (jnp.max(amax) + 1e-5).reshape(1)   # tiny host-side reduce
        out2d = _main_call(x2d, packed, m2d=m2d, scale1=scale1, tm=tm)
    return out2d.reshape(b, c, s)


# ------------------------- parameter construction ----------------------------
def make_params(key):
    k1, k2, _ = jax.random.split(key, 3)
    # encoder stand-in (patch value embedding)
    w_emb = jax.random.normal(k1, (PATCH_LEN, D_MODEL), jnp.float32) * 0.02
    b_emb = jnp.zeros((1, D_MODEL), jnp.float32)
    # PretrainHead linear: orthogonal init (gain = min(1.41, 1.0) = 1.0), zero bias
    a = jax.random.normal(k2, (D_MODEL, PATCH_LEN), jnp.float32)
    q, _ = jnp.linalg.qr(a)                      # (D_MODEL, PATCH_LEN), orthonormal cols
    w_head = q.astype(jnp.float32)
    b_head = jnp.zeros((1, PATCH_LEN), jnp.float32)
    return {"w_emb": w_emb, "b_emb": b_emb, "w_head": w_head, "b_head": b_head}


def pack_params(params):
    """Expand per-patch linears into block-diagonal slab weights (done once).

    Learned weights stay f32 (tolerance); the structural pooling/broadcast
    constants (exactly 0, 1, 1/32) are bf16 -> exact values, half the bytes.
    """
    eye_p = jnp.eye(N_PATCHES, dtype=jnp.float32)
    w_emb_big = jnp.kron(eye_p, params["w_emb"])                       # [S, P*D] f32
    b_emb_big = jnp.tile(params["b_emb"], (1, N_PATCHES))              # [1, P*D] f32
    w_pool = jnp.kron(
        eye_p, jnp.full((D_MODEL, 1), 1.0 / D_MODEL, jnp.float32)
    ).astype(jnp.bfloat16)                                             # [P*D, P] bf16
    w_bcast = jnp.kron(
        eye_p, jnp.ones((1, D_MODEL), jnp.float32)
    ).astype(jnp.bfloat16)                                             # [P, P*D] bf16
    w_head_big = jnp.kron(eye_p, params["w_head"])                     # [P*D, S] f32
    b_head_big = jnp.tile(params["b_head"], (1, N_PATCHES))            # [1, S] f32
    return {
        "w_emb_big": w_emb_big,
        "b_emb_big": b_emb_big,
        "w_pool": w_pool,
        "w_bcast": w_bcast,
        "w_head_big": w_head_big,
        "b_head_big": b_head_big,
    }


# -------------------------- pure-JAX reference -------------------------------
def reference_forward(x_enc, params):
    b, c, s = x_enc.shape
    m = jnp.ones((b, 1, s), jnp.float32)
    cnt = jnp.sum(m, -1, keepdims=True) + EPS
    mean = jnp.sum(x_enc * m, -1, keepdims=True) / cnt
    var = jnp.sum(m * (x_enc - mean) ** 2, -1, keepdims=True) / cnt
    std = jnp.sqrt(var + EPS)
    xn = (x_enc - mean) / std
    scale = jnp.max(jnp.abs(xn)) + 1e-5
    xn = xn / scale
    patches = xn.reshape(b, c, N_PATCHES, PATCH_LEN)
    h = patches @ params["w_emb"] + params["b_emb"][0]
    h = jnp.clip(h, -10.0, 10.0)
    hm = jnp.mean(h, -1, keepdims=True)
    hv = jnp.mean((h - hm) ** 2, -1, keepdims=True)
    hn = (h - hm) / jnp.sqrt(hv + 1e-5)
    y = hn @ params["w_head"] + params["b_head"][0]
    y = jax.nn.gelu(y, approximate=False)
    y = jnp.clip(y, -10.0, 10.0)
    dec = y.reshape(b, c, N_PATCHES * PATCH_LEN) * scale
    return dec * std + mean


# ------------------------------- main ----------------------------------------
if __name__ == "__main__":
    key = jax.random.PRNGKey(0)
    kx, kp = jax.random.split(key)
    x_enc = jax.random.normal(kx, (B, C, SEQ), jnp.float32)
    params = make_params(kp)
    packed = pack_params(params)          # done once, outside jit

    fwd = jax.jit(tiny_time_mixer_adapter_forward)

    # single-block fused path (benchmark shape)
    out = jax.block_until_ready(fwd(x_enc, packed))
    ref = reference_forward(x_enc, params)
    assert out.shape == (B, C, SEQ), out.shape
    assert bool(jnp.all(jnp.isfinite(out)))
    assert jnp.allclose(out, ref, rtol=1e-4, atol=1e-4), float(
        jnp.max(jnp.abs(out - ref))
    )

    # masked path (all-ones input_mask) must agree with the unmasked path
    ones_mask = jnp.ones((B, SEQ), jnp.float32)
    out_m = jax.block_until_ready(fwd(x_enc, packed, ones_mask))
    assert jnp.allclose(out_m, ref, rtol=1e-4, atol=1e-4), float(
        jnp.max(jnp.abs(out_m - ref))
    )

    # larger B*C exercises the gridded two-pass (megacore) path with the
    # cross-tile global scale reduction
    B2, C2 = 8, 64                         # B*C = 512 -> two 256-row tiles
    x_big = jax.random.normal(jax.random.PRNGKey(1), (B2, C2, SEQ), jnp.float32)
    out_big = jax.block_until_ready(fwd(x_big, packed))
    ref_big = reference_forward(x_big, params)
    assert jnp.allclose(out_big, ref_big, rtol=1e-4, atol=1e-4), float(
        jnp.max(jnp.abs(out_big - ref_big))
    )

    print("KERNEL_OK")
</pallas_src>

<mosaic_0001>
module attributes {stable_mosaic.version = 11 : i64} {
  func.func @_fused_kernel(%arg0: i32, %arg1: memref<8x64xf32, #tpu.memory_space<vmem>>, %arg2: memref<64x256xf32, #tpu.memory_space<vmem>>, %arg3: memref<1x256xf32, #tpu.memory_space<vmem>>, %arg4: memref<256x8xbf16, #tpu.memory_space<vmem>>, %arg5: memref<8x256xbf16, #tpu.memory_space<vmem>>, %arg6: memref<256x64xf32, #tpu.memory_space<vmem>>, %arg7: memref<1x64xf32, #tpu.memory_space<vmem>>, %arg8: memref<8x64xf32, #tpu.memory_space<vmem>>) attributes {dimension_semantics = [#tpu.dimension_semantics<parallel>], iteration_bounds = array<i64: 1>, scalar_prefetch = 0 : i64, scratch_operands = 0 : i64, tpu.core_type = #tpu.core_type<tc>, window_params = [{transform_indices = @transform_0, window_bounds = array<i64: 8, 64>}, {pipeline_mode = #tpu.pipeline_mode<synchronous>, transform_indices = @transform_1, window_bounds = array<i64: 64, 256>}, {pipeline_mode = #tpu.pipeline_mode<synchronous>, transform_indices = @transform_2, window_bounds = array<i64: 1, 256>}, {pipeline_mode = #tpu.pipeline_mode<synchronous>, transform_indices = @transform_3, window_bounds = array<i64: 256, 8>}, {pipeline_mode = #tpu.pipeline_mode<synchronous>, transform_indices = @transform_4, window_bounds = array<i64: 8, 256>}, {pipeline_mode = #tpu.pipeline_mode<synchronous>, transform_indices = @transform_5, window_bounds = array<i64: 256, 64>}, {pipeline_mode = #tpu.pipeline_mode<synchronous>, transform_indices = @transform_6, window_bounds = array<i64: 1, 64>}, {transform_indices = @transform_7, window_bounds = array<i64: 8, 64>}]} {
    %c0 = arith.constant 0 : index
    %c0_0 = arith.constant 0 : index
    %0 = vector.load %arg1[%c0, %c0_0] : memref<8x64xf32, #tpu.memory_space<vmem>>, vector<8x64xf32>
    %cst = arith.constant dense<0.000000e+00> : vector<8xf32>
    %1 = vector.multi_reduction <add>, %0, %cst [1] : vector<8x64xf32> to vector<8xf32>
    %2 = vector.shape_cast %1 : vector<8xf32> to vector<8x1xf32>
    %cst_1 = arith.constant 0.0156249972 : f32
    %3 = vector.broadcast %cst_1 : f32 to vector<8x1xf32>
    %4 = arith.mulf %2, %3 : vector<8x1xf32>
    %5 = vector.broadcast %4 : vector<8x1xf32> to vector<8x64xf32>
    %6 = arith.subf %0, %5 : vector<8x64xf32>
    %7 = arith.mulf %6, %6 : vector<8x64xf32>
    %cst_2 = arith.constant dense<0.000000e+00> : vector<8xf32>
    %8 = vector.multi_reduction <add>, %7, %cst_2 [1] : vector<8x64xf32> to vector<8xf32>
    %9 = vector.shape_cast %8 : vector<8xf32> to vector<8x1xf32>
    %cst_3 = arith.constant 0.0156249972 : f32
    %10 = vector.broadcast %cst_3 : f32 to vector<8x1xf32>
    %11 = arith.mulf %9, %10 : vector<8x1xf32>
    %cst_4 = arith.constant 9.99999974E-6 : f32
    %12 = vector.broadcast %cst_4 : f32 to vector<8x1xf32>
    %13 = arith.addf %11, %12 : vector<8x1xf32>
    %14 = math.rsqrt %13 : vector<8x1xf32>
    %cst_5 = arith.constant 9.99999974E-6 : f32
    %15 = vector.broadcast %cst_5 : f32 to vector<8x1xf32>
    %16 = arith.addf %11, %15 : vector<8x1xf32>
    %17 = arith.mulf %16, %14 : vector<8x1xf32>
    %18 = vector.broadcast %4 : vector<8x1xf32> to vector<8x64xf32>
    %19 = arith.subf %0, %18 : vector<8x64xf32>
    %20 = vector.broadcast %14 : vector<8x1xf32> to vector<8x64xf32>
    %21 = arith.mulf %19, %20 : vector<8x64xf32>
    %22 = arith.cmpf one, %21, %21 : vector<8x64xf32>
    %cst_6 = arith.constant 0.000000e+00 : f32
    %23 = vector.broadcast %cst_6 : f32 to vector<8x64xf32>
    %24 = arith.select %22, %23, %21 : vector<8x64xi1>, vector<8x64xf32>
    %cst_7 = arith.constant 3.40282347E+38 : f32
    %25 = vector.broadcast %cst_7 : f32 to vector<8x64xf32>
    %26 = arith.cmpf ogt, %24, %25 : vector<8x64xf32>
    %cst_8 = arith.constant 0.000000e+00 : f32
    %27 = vector.broadcast %cst_8 : f32 to vector<8x64xf32>
    %28 = arith.select %26, %27, %24 : vector<8x64xi1>, vector<8x64xf32>
    %cst_9 = arith.constant 0.000000e+00 : f32
    %cst_10 = arith.constant 3.40282347E+38 : f32
    %29 = arith.subf %cst_9, %cst_10 : f32
    %30 = vector.broadcast %29 : f32 to vector<8x64xf32>
    %31 = arith.cmpf olt, %28, %30 : vector<8x64xf32>
    %cst_11 = arith.constant 0.000000e+00 : f32
    %32 = vector.broadcast %cst_11 : f32 to vector<8x64xf32>
    %33 = arith.select %31, %32, %28 : vector<8x64xi1>, vector<8x64xf32>
    %34 = math.absf %33 : vector<8x64xf32>
    %cst_12 = arith.constant dense<0xFF800000> : vector<8xf32>
    %35 = vector.multi_reduction <maximumf>, %34, %cst_12 [1] : vector<8x64xf32> to vector<8xf32>
    %36 = vector.shape_cast %35 : vector<8xf32> to vector<8x1xf32>
    %cst_13 = arith.constant dense<0xFF800000> : vector<1xf32>
    %37 = vector.multi_reduction <maximumf>, %36, %cst_13 [0] : vector<8x1xf32> to vector<1xf32>
    %38 = vector.shape_cast %37 : vector<1xf32> to vector<1x1xf32>
    %cst_14 = arith.constant 9.99999974E-6 : f32
    %39 = vector.broadcast %cst_14 : f32 to vector<1x1xf32>
    %40 = arith.addf %38, %39 : vector<1x1xf32>
    %cst_15 = arith.constant 1.000000e+00 : f32
    %41 = vector.broadcast %cst_15 : f32 to vector<1x1xf32>
    %42 = arith.divf %41, %40 : vector<1x1xf32>
    %43 = vector.broadcast %42 : vector<1x1xf32> to vector<8x64xf32>
    %44 = arith.mulf %33, %43 : vector<8x64xf32>
    %c0_16 = arith.constant 0 : index
    %c0_17 = arith.constant 0 : index
    %45 = vector.load %arg2[%c0_16, %c0_17] : memref<64x256xf32, #tpu.memory_space<vmem>>, vector<64x256xf32>
    %cst_18 = arith.constant dense<0.000000e+00> : vector<8x256xf32>
    %46 = tpu.matmul %44, %45, %cst_18 {dimension_numbers = #tpu.dot_dimension_numbers<[1], [0], [0], [1], [0, 0, 1, 1], [], []>} : vector<8x64xf32>, vector<64x256xf32>, vector<8x256xf32> -> vector<8x256xf32>
    %c0_19 = arith.constant 0 : index
    %c0_20 = arith.constant 0 : index
    %47 = vector.load %arg3[%c0_19, %c0_20] : memref<1x256xf32, #tpu.memory_space<vmem>>, vector<1x256xf32>
    %48 = vector.broadcast %47 : vector<1x256xf32> to vector<8x256xf32>
    %49 = arith.addf %46, %48 : vector<8x256xf32>
    %cst_21 = arith.constant -1.000000e+01 : f32
    %cst_22 = arith.constant 1.000000e+01 : f32
    %50 = vector.broadcast %cst_21 : f32 to vector<8x256xf32>
    %51 = arith.maximumf %50, %49 : vector<8x256xf32>
    %52 = vector.broadcast %cst_22 : f32 to vector<8x256xf32>
    %53 = arith.minimumf %52, %51 : vector<8x256xf32>
    %c0_23 = arith.constant 0 : index
    %c0_24 = arith.constant 0 : index
    %54 = vector.load %arg4[%c0_23, %c0_24] : memref<256x8xbf16, #tpu.memory_space<vmem>>, vector<256x8xbf16>
    %cst_25 = arith.constant dense<0.000000e+00> : vector<8x8xf32>
    %55 = tpu.matmul %53, %54, %cst_25 {dimension_numbers = #tpu.dot_dimension_numbers<[1], [0], [0], [1], [0, 0, 1, 1], [], []>} : vector<8x256xf32>, vector<256x8xbf16>, vector<8x8xf32> -> vector<8x8xf32>
    %c0_26 = arith.constant 0 : index
    %c0_27 = arith.constant 0 : index
    %56 = vector.load %arg5[%c0_26, %c0_27] : memref<8x256xbf16, #tpu.memory_space<vmem>>, vector<8x256xbf16>
    %cst_28 = arith.constant dense<0.000000e+00> : vector<8x256xf32>
    %57 = tpu.matmul %55, %56, %cst_28 {dimension_numbers = #tpu.dot_dimension_numbers<[1], [0], [0], [1], [0, 0, 1, 1], [], []>} : vector<8x8xf32>, vector<8x256xbf16>, vector<8x256xf32> -> vector<8x256xf32>
    %58 = arith.subf %53, %57 : vector<8x256xf32>
    %59 = arith.mulf %58, %58 : vector<8x256xf32>
    %c0_29 = arith.constant 0 : index
    %c0_30 = arith.constant 0 : index
    %60 = vector.load %arg4[%c0_29, %c0_30] : memref<256x8xbf16, #tpu.memory_space<vmem>>, vector<256x8xbf16>
    %cst_31 = arith.constant dense<0.000000e+00> : vector<8x8xf32>
    %61 = tpu.matmul %59, %60, %cst_31 {dimension_numbers = #tpu.dot_dimension_numbers<[1], [0], [0], [1], [0, 0, 1, 1], [], []>} : vector<8x256xf32>, vector<256x8xbf16>, vector<8x8xf32> -> vector<8x8xf32>
    %c0_32 = arith.constant 0 : index
    %c0_33 = arith.constant 0 : index
    %62 = vector.load %arg5[%c0_32, %c0_33] : memref<8x256xbf16, #tpu.memory_space<vmem>>, vector<8x256xbf16>
    %cst_34 = arith.constant dense<0.000000e+00> : vector<8x256xf32>
    %63 = tpu.matmul %61, %62, %cst_34 {dimension_numbers = #tpu.dot_dimension_numbers<[1], [0], [0], [1], [0, 0, 1, 1], [], []>} : vector<8x8xf32>, vector<8x256xbf16>, vector<8x256xf32> -> vector<8x256xf32>
    %cst_35 = arith.constant 9.99999974E-6 : f32
    %64 = vector.broadcast %cst_35 : f32 to vector<8x256xf32>
    %65 = arith.addf %63, %64 : vector<8x256xf32>
    %66 = math.rsqrt %65 : vector<8x256xf32>
    %67 = arith.mulf %58, %66 : vector<8x256xf32>
    %c0_36 = arith.constant 0 : index
    %c0_37 = arith.constant 0 : index
    %68 = vector.load %arg6[%c0_36, %c0_37] : memref<256x64xf32, #tpu.memory_space<vmem>>, vector<256x64xf32>
    %cst_38 = arith.constant dense<0.000000e+00> : vector<8x64xf32>
    %69 = tpu.matmul %67, %68, %cst_38 {dimension_numbers = #tpu.dot_dimension_numbers<[1], [0], [0], [1], [0, 0, 1, 1], [], []>} : vector<8x256xf32>, vector<256x64xf32>, vector<8x64xf32> -> vector<8x64xf32>
    %c0_39 = arith.constant 0 : index
    %c0_40 = arith.constant 0 : index
    %70 = vector.load %arg7[%c0_39, %c0_40] : memref<1x64xf32, #tpu.memory_space<vmem>>, vector<1x64xf32>
    %71 = vector.broadcast %70 : vector<1x64xf32> to vector<8x64xf32>
    %72 = arith.addf %69, %71 : vector<8x64xf32>
    %cst_41 = arith.constant 5.000000e-01 : f32
    %73 = vector.broadcast %cst_41 : f32 to vector<8x64xf32>
    %74 = arith.mulf %73, %72 : vector<8x64xf32>
    %cst_42 = arith.constant 0.707106769 : f32
    %75 = vector.broadcast %cst_42 : f32 to vector<8x64xf32>
    %76 = arith.mulf %72, %75 : vector<8x64xf32>
    %77 = math.erf %76 : vector<8x64xf32>
    %cst_43 = arith.constant 1.000000e+00 : f32
    %78 = vector.broadcast %cst_43 : f32 to vector<8x64xf32>
    %79 = arith.addf %78, %77 : vector<8x64xf32>
    %80 = arith.mulf %74, %79 : vector<8x64xf32>
    %cst_44 = arith.constant -1.000000e+01 : f32
    %cst_45 = arith.constant 1.000000e+01 : f32
    %81 = vector.broadcast %cst_44 : f32 to vector<8x64xf32>
    %82 = arith.maximumf %81, %80 : vector<8x64xf32>
    %83 = vector.broadcast %cst_45 : f32 to vector<8x64xf32>
    %84 = arith.minimumf %83, %82 : vector<8x64xf32>
    %85 = vector.broadcast %40 : vector<1x1xf32> to vector<8x64xf32>
    %86 = arith.mulf %84, %85 : vector<8x64xf32>
    %87 = vector.broadcast %17 : vector<8x1xf32> to vector<8x64xf32>
    %88 = arith.mulf %86, %87 : vector<8x64xf32>
    %89 = vector.broadcast %4 : vector<8x1xf32> to vector<8x64xf32>
    %90 = arith.addf %88, %89 : vector<8x64xf32>
    %91 = arith.cmpf one, %90, %90 : vector<8x64xf32>
    %cst_46 = arith.constant 0.000000e+00 : f32
    %92 = vector.broadcast %cst_46 : f32 to vector<8x64xf32>
    %93 = arith.select %91, %92, %90 : vector<8x64xi1>, vector<8x64xf32>
    %cst_47 = arith.constant 3.40282347E+38 : f32
    %94 = vector.broadcast %cst_47 : f32 to vector<8x64xf32>
    %95 = arith.cmpf ogt, %93, %94 : vector<8x64xf32>
    %cst_48 = arith.constant 0.000000e+00 : f32
    %96 = vector.broadcast %cst_48 : f32 to vector<8x64xf32>
    %97 = arith.select %95, %96, %93 : vector<8x64xi1>, vector<8x64xf32>
    %cst_49 = arith.constant 0.000000e+00 : f32
    %cst_50 = arith.constant 3.40282347E+38 : f32
    %98 = arith.subf %cst_49, %cst_50 : f32
    %99 = vector.broadcast %98 : f32 to vector<8x64xf32>
    %100 = arith.cmpf olt, %97, %99 : vector<8x64xf32>
    %cst_51 = arith.constant 0.000000e+00 : f32
    %101 = vector.broadcast %cst_51 : f32 to vector<8x64xf32>
    %102 = arith.select %100, %101, %97 : vector<8x64xi1>, vector<8x64xf32>
    %c0_52 = arith.constant 0 : index
    %c0_53 = arith.constant 0 : index
    %103 = vector.load %arg8[%c0_52, %c0_53] : memref<8x64xf32, #tpu.memory_space<vmem>>, vector<8x64xf32>
    tpu.vector_store %arg8[%c0_52, %c0_53], %102 {strides = array<i32>} : memref<8x64xf32, #tpu.memory_space<vmem>>, vector<8x64xf32>,
    return
  }
  func.func @transform_0(%arg0: i32) -> (i32, i32) {
    %c0_i32 = arith.constant 0 : i32
    %c0_i32_0 = arith.constant 0 : i32
    return %arg0, %c0_i32 : i32, i32
  }
  func.func @transform_1(%arg0: i32) -> (i32, i32) {
    %c0_i32 = arith.constant 0 : i32
    %c0_i32_0 = arith.constant 0 : i32
    %c0_i32_1 = arith.constant 0 : i32
    return %c0_i32, %c0_i32_0 : i32, i32
  }
  func.func @transform_2(%arg0: i32) -> (i32, i32) {
    %c0_i32 = arith.constant 0 : i32
    %c0_i32_0 = arith.constant 0 : i32
    %c0_i32_1 = arith.constant 0 : i32
    return %c0_i32, %c0_i32_0 : i32, i32
  }
  func.func @transform_3(%arg0: i32) -> (i32, i32) {
    %c0_i32 = arith.constant 0 : i32
    %c0_i32_0 = arith.constant 0 : i32
    %c0_i32_1 = arith.constant 0 : i32
    return %c0_i32, %c0_i32_0 : i32, i32
  }
  func.func @transform_4(%arg0: i32) -> (i32, i32) {
    %c0_i32 = arith.constant 0 : i32
    %c0_i32_0 = arith.constant 0 : i32
    %c0_i32_1 = arith.constant 0 : i32
    return %c0_i32, %c0_i32_0 : i32, i32
  }
  func.func @transform_5(%arg0: i32) -> (i32, i32) {
    %c0_i32 = arith.constant 0 : i32
    %c0_i32_0 = arith.constant 0 : i32
    %c0_i32_1 = arith.constant 0 : i32
    return %c0_i32, %c0_i32_0 : i32, i32
  }
  func.func @transform_6(%arg0: i32) -> (i32, i32) {
    %c0_i32 = arith.constant 0 : i32
    %c0_i32_0 = arith.constant 0 : i32
    %c0_i32_1 = arith.constant 0 : i32
    return %c0_i32, %c0_i32_0 : i32, i32
  }
  func.func @transform_7(%arg0: i32) -> (i32, i32) {
    %c0_i32 = arith.constant 0 : i32
    %c0_i32_0 = arith.constant 0 : i32
    return %arg0, %c0_i32 : i32, i32
  }
}

</mosaic_0001>

<llo_original>
// kernel: tiny_time_mixer_adapter_forward.1
$region0: #{tiny_time_mixer_adapter_forward.1}
  #allocation0 [shape = 'u32[]', space=smem, size = 0x4, offset = 0x4, fixed_abs, tag = 'smem constant byte address 0x4 - core index']
  #allocation1 [shape = 'u32[144,128]{1,0:T(1,128)}', space=vmem, size = 0x12000, scoped, tag = 'internal scratch']
  %s0 = inlined_call_operand.vmem [shape: f32[8,64], index: 0, kind: input, shape index: {}]
  %s1 = inlined_call_operand.vmem [shape: f32[64,256], index: 1, kind: input, shape index: {}]
  %s2 = inlined_call_operand.vmem [shape: f32[1,256], index: 2, kind: input, shape index: {}]
  %s3 = inlined_call_operand.vmem [shape: bf16[256,8], index: 3, kind: input, shape index: {}]
  %s4 = inlined_call_operand.vmem [shape: bf16[8,256], index: 4, kind: input, shape index: {}]
  %s5 = inlined_call_operand.vmem [shape: f32[256,64], index: 5, kind: input, shape index: {}]
  %s6 = inlined_call_operand.vmem [shape: f32[1,64], index: 6, kind: input, shape index: {}]
  %s7 = inlined_call_operand.hbm [shape: f32[8,64], index: 7, kind: output, shape index: {}]
  %s8 = sld [smem:[#allocation0]]
  $region38: #{tiny_time_mixer_adapter_forward.1} parent=0
    _
  %s10 = ssub.s32 1, %s8
  %s11 = scalar_select 0, %s10, %s8
  $region1: #{tiny_time_mixer_adapter_forward.1} parent=0
    #allocation2 [shape = 'u8[4096]{0}', space=vmem, size = 0x1000, scoped, tag = 'output window, operand 0, single buffered']
    #allocation3 [shape = 's32[1]{0}', space=sflag, size = 0x4, scoped, tag = 'scoped memory for tiny_time_mixer_adapter_forward.1']
    %12 = vsyncpa [#allocation3], 0
    // Predicated region
    $region2: #{tiny_time_mixer_adapter_forward.1} parent=1 // pred_check
      _
    $region3: #{tiny_time_mixer_adapter_forward.1} parent=1 // pred_check_branch
      %14 = sbr.rel (0) target = $region5
    $region4: #{tiny_time_mixer_adapter_forward.1} parent=1 // pred_region
      _
    $region5: #{tiny_time_mixer_adapter_forward.1} parent=1 // pred_fallthru
      _
    // Predicated region
    $region6: #{tiny_time_mixer_adapter_forward.1} parent=1 // pred_check
      _
    $region7: #{tiny_time_mixer_adapter_forward.1} parent=1 // pred_check_branch
      %16 = sbr.rel (0) target = $region9
    $region8: #{tiny_time_mixer_adapter_forward.1} parent=1 // pred_region
      _
    $region9: #{tiny_time_mixer_adapter_forward.1} parent=1 // pred_fallthru
      _
    // Predicated region
    $region10: #{tiny_time_mixer_adapter_forward.1} parent=1 // pred_check
      _
    $region11: #{tiny_time_mixer_adapter_forward.1} parent=1 // pred_check_branch
      %18 = sbr.rel (0) target = $region13
    $region12: #{tiny_time_mixer_adapter_forward.1} parent=1 // pred_region
      _
    $region13: #{tiny_time_mixer_adapter_forward.1} parent=1 // pred_fallthru
      _
    // Predicated region
    $region14: #{tiny_time_mixer_adapter_forward.1} parent=1 // pred_check
      _
    $region15: #{tiny_time_mixer_adapter_forward.1} parent=1 // pred_check_branch
      %20 = sbr.rel (0) target = $region17
    $region16: #{tiny_time_mixer_adapter_forward.1} parent=1 // pred_region
      _
    $region17: #{tiny_time_mixer_adapter_forward.1} parent=1 // pred_fallthru
      _
    // Predicated region
    $region18: #{tiny_time_mixer_adapter_forward.1} parent=1 // pred_check
      _
    $region19: #{tiny_time_mixer_adapter_forward.1} parent=1 // pred_check_branch
      %22 = sbr.rel (0) target = $region21
    $region20: #{tiny_time_mixer_adapter_forward.1} parent=1 // pred_region
      _
    $region21: #{tiny_time_mixer_adapter_forward.1} parent=1 // pred_fallthru
      _
    // Predicated region
    $region22: #{tiny_time_mixer_adapter_forward.1} parent=1 // pred_check
      _
    $region23: #{tiny_time_mixer_adapter_forward.1} parent=1 // pred_check_branch
      %24 = sbr.rel (0) target = $region25
    $region24: #{tiny_time_mixer_adapter_forward.1} parent=1 // pred_region
      _
    $region25: #{tiny_time_mixer_adapter_forward.1} parent=1 // pred_fallthru
      _
    // Predicated region
    $region26: #{tiny_time_mixer_adapter_forward.1} parent=1 // pred_check
      _
    $region27: #{tiny_time_mixer_adapter_forward.1} parent=1 // pred_check_branch
      %26 = sbr.rel (0) target = $region29
    $region28: #{tiny_time_mixer_adapter_forward.1} parent=1 // pred_region
      _
    $region29: #{tiny_time_mixer_adapter_forward.1} parent=1 // pred_fallthru
      _
    %v28 = vld [vmem:[%s0] sm:$0xff]
    %vm29 = vcmask 523264
    %v30 = vsel %vm29, %v28, 0.0
    %31 = vadd.xlane.f32.xlu0 %v30
    %v32 = vpop.xlane.xlu0 %31
    %v33 = vmul.f32 %v32, 0.015624997
    %v34 = vsub.f32 %v28, %v33
    %v35 = vmul.f32 %v34, %v34
    %v36 = vsel %vm29, %v35, 0.0
    %37 = vadd.xlane.f32.xlu0 %v36
    %v38 = vpop.xlane.xlu0 %37
    %v39 = vmul.f32 %v38, 0.015624997
    %v40 = vadd.f32 %v39, 1e-05
    %v41 = vrsqrt.pop %v40
    %v42 = vmul.f32 %v40, %v41
    %v43 = vmul.f32 %v34, %v41
    %vm44 = vcmp.ne.f32.partialorder %v43, %v43
    %v45 = vsel %vm44, 0.0, %v43
    %vm46 = vcmp.gt.f32.partialorder %v45, 3.4028235e+38
    %v47 = vsel %vm46, 0.0, %v45
    %vm48 = vcmp.lt.f32.partialorder %v47, -3.4028235e+38
    %v49 = vsel %vm48, 0.0, %v47
    %v50 = vand.u32 2147483647, %v49
    %v51 = vsel %vm29, %v50, -inf
    %52 = vmax.xlane.f32.xlu0 %v51
    %v53 = vpop.xlane.xlu0 %52
    %v54 = vrot.slane %v53, 4
    %v55 = vmax.f32 %v53, %v54
    %v56 = vrot.slane %v55, 2
    %v57 = vmax.f32 %v55, %v56
    %v58 = vrot.slane %v57, 1
    %v59 = vmax.f32 %v57, %v58
    %v60 = vadd.f32 %v59, 1e-05
    %v61 = vrcp.pop %v60
    %v62 = vmul.f32 1.0, %v61
    %v63 = vmul.f32 %v49, %v62
    %v64 = vld [vmem:[%s1] sm:$0xff]
    %v65 = vld [vmem:[%s1 + $0x8] sm:$0xff]
    %v66 = vld [vmem:[%s1 + $0x10] sm:$0xff]
    %v67 = vld [vmem:[%s1 + $0x18] sm:$0xff]
    %v68 = vld [vmem:[%s1 + $0x20] sm:$0xff]
    %v69 = vld [vmem:[%s1 + $0x28] sm:$0xff]
    %v70 = vld [vmem:[%s1 + $0x30] sm:$0xff]
    %v71 = vld [vmem:[%s1 + $0x38] sm:$0xff]
    %v72 = vld [vmem:[%s1 + $0x40] sm:$0xff]
    %v73 = vld [vmem:[%s1 + $0x48] sm:$0xff]
    %v74 = vld [vmem:[%s1 + $0x50] sm:$0xff]
    %v75 = vld [vmem:[%s1 + $0x58] sm:$0xff]
    %v76 = vld [vmem:[%s1 + $0x60] sm:$0xff]
    %v77 = vld [vmem:[%s1 + $0x68] sm:$0xff]
    %v78 = vld [vmem:[%s1 + $0x70] sm:$0xff]
    %v79 = vld [vmem:[%s1 + $0x78] sm:$0xff]
    %v80 = vld [vmem:[%s2] sm:$0x3]
    %v82 = vlaneseq
    %v83 = vshrl.u32 %v82, 7
    %v84 = vsub.s32 0, %v83
    %v85 = vrot.slane %v80, %v84
    %v86 = vlaneseq
    %v87 = vshrl.u32 %v86, 7
    %v88 = vsub.s32 1, %v87
    %v89 = vrot.slane %v80, %v88
    %v93 = vsel %vm29, %v63, 0
    %95 = vmatprep.subr.mxu0 %v65
    %96 = vmatpush1.msra.mxu0 %v64
    %97 = vmatprep.subr.mxu0 %v67
    %98 = vmatpush1.msra.mxu0 %v66
    %99 = vmatprep.subr.mxu0 %v69
    %100 = vmatpush1.msra.mxu0 %v68
    %101 = vmatprep.subr.mxu0 %v71
    %102 = vmatpush1.msra.mxu0 %v70
    %103 = vmatprep.subr.mxu0 %v73
    %104 = vmatpush1.msra.mxu0 %v72
    %105 = vmatprep.subr.mxu0 %v75
    %106 = vmatpush1.msra.mxu0 %v74
    %107 = vmatprep.subr.mxu0 %v77
    %108 = vmatpush1.msra.mxu0 %v76
    %109 = vmatprep.subr.mxu0 %v79
    %110 = vmatpush1.msra.mxu0 %v78
    %111 = vmatprep.subr.mxu0 0.0
    %112 = vmatpush1.msra.mxu0 0.0
    %113 = vmatprep.subr.mxu0 0.0
    %114 = vmatpush1.msra.mxu0 0.0
    %115 = vmatprep.subr.mxu0 0.0
    %116 = vmatpush1.msra.mxu0 0.0
    %117 = vmatprep.subr.mxu0 0.0
    %118 = vmatpush1.msra.mxu0 0.0
    %119 = vmatprep.subr.mxu0 0.0
    %120 = vmatpush1.msra.mxu0 0.0
    %121 = vmatprep.subr.mxu0 0.0
    %122 = vmatpush1.msra.mxu0 0.0
    %123 = vmatprep.subr.mxu0 0.0
    %124 = vmatpush1.msra.mxu0 0.0
    %125 = vmatprep.subr.mxu0 0.0
    %126 = vmatpush1.msra.mxu0 0.0
    %127 = vmatprep.subr.mxu0 0.0
    %128 = vmatpush1.msra.mxu0 0.0
    %129 = vmatprep.subr.mxu0 0.0
    %130 = vmatpush1.msra.mxu0 0.0
    %131 = vmatprep.subr.mxu0 0.0
    %132 = vmatpush1.msra.mxu0 0.0
    %133 = vmatprep.subr.mxu0 0.0
    %134 = vmatpush1.msra.mxu0 0.0
    %135 = vmatprep.subr.mxu0 0.0
    %136 = vmatpush1.msra.mxu0 0.0
    %137 = vmatprep.subr.mxu0 0.0
    %138 = vmatpush1.msra.mxu0 0.0
    %139 = vmatprep.subr.mxu0 0.0
    %140 = vmatpush1.msra.mxu0 0.0
    %141 = vmatprep.subr.mxu0 0.0
    %142 = vmatpush1.msra.mxu0 0.0
    %143 = vmatprep.subr.mxu0 0.0
    %144 = vmatpush1.msra.mxu0 0.0
    %145 = vmatprep.subr.mxu0 0.0
    %146 = vmatpush1.msra.mxu0 0.0
    %147 = vmatprep.subr.mxu0 0.0
    %148 = vmatpush1.msra.mxu0 0.0
    %149 = vmatprep.subr.mxu0 0.0
    %150 = vmatpush1.msra.mxu0 0.0
    %151 = vmatprep.subr.mxu0 0.0
    %152 = vmatpush1.msra.mxu0 0.0
    %153 = vmatprep.subr.mxu0 0.0
    %154 = vmatpush1.msra.mxu0 0.0
    %155 = vmatprep.subr.mxu0 0.0
    %156 = vmatpush1.msra.mxu0 0.0
    %157 = vmatprep.subr.mxu0 0.0
    %158 = vmatpush1.msra.mxu0 0.0
    %159 = vmatprep.mubr.f32.mxu0 0.0
    %160 = vmatmul.mubr.f32.gmra.mrb[0].mxu0 %v93
    %v161 = vpop.f32.mrb[0].mxu0
    %v162 = vadd.f32 %v85, %v161
    %v163 = vpop.f32.mrb[0].mxu0
    %v164 = vadd.f32 %v89, %v163
    %165 = vdwg.mxu0
    %v166 = vmax.f32 %v162, -10.0
    %v167 = vmax.f32 %v164, -10.0
    %v168 = vmin.f32 %v166, 10.0
    %v169 = vmin.f32 %v167, 10.0
    %v170 = vld [vmem:[%s3] sm:$0xf]
    %v171 = vld [vmem:[%s3 + $0x4] sm:$0xf]
    %v172 = vld [vmem:[%s3 + $0x8] sm:$0xf]
    %v173 = vld [vmem:[%s3 + $0xc] sm:$0xf]
    %v174 = vld [vmem:[%s3 + $0x10] sm:$0xf]
    %v175 = vld [vmem:[%s3 + $0x14] sm:$0xf]
    %v176 = vld [vmem:[%s3 + $0x18] sm:$0xf]
    %v177 = vld [vmem:[%s3 + $0x1c] sm:$0xf]
    %v178 = vld [vmem:[%s3 + $0x20] sm:$0xf]
    %v179 = vld [vmem:[%s3 + $0x24] sm:$0xf]
    %v180 = vld [vmem:[%s3 + $0x28] sm:$0xf]
    %v181 = vld [vmem:[%s3 + $0x2c] sm:$0xf]
    %v182 = vld [vmem:[%s3 + $0x30] sm:$0xf]
    %v183 = vld [vmem:[%s3 + $0x34] sm:$0xf]
    %v184 = vld [vmem:[%s3 + $0x38] sm:$0xf]
    %v185 = vld [vmem:[%s3 + $0x3c] sm:$0xf]
    %v186 = vld [vmem:[%s3 + $0x40] sm:$0xf]
    %v187 = vld [vmem:[%s3 + $0x44] sm:$0xf]
    %v188 = vld [vmem:[%s3 + $0x48] sm:$0xf]
    %v189 = vld [vmem:[%s3 + $0x4c] sm:$0xf]
    %v190 = vld [vmem:[%s3 + $0x50] sm:$0xf]
    %v191 = vld [vmem:[%s3 + $0x54] sm:$0xf]
    %v192 = vld [vmem:[%s3 + $0x58] sm:$0xf]
    %v193 = vld [vmem:[%s3 + $0x5c] sm:$0xf]
    %v194 = vld [vmem:[%s3 + $0x60] sm:$0xf]
    %v195 = vld [vmem:[%s3 + $0x64] sm:$0xf]
    %v196 = vld [vmem:[%s3 + $0x68] sm:$0xf]
    %v197 = vld [vmem:[%s3 + $0x6c] sm:$0xf]
    %v198 = vld [vmem:[%s3 + $0x70] sm:$0xf]
    %v199 = vld [vmem:[%s3 + $0x74] sm:$0xf]
    %v200 = vld [vmem:[%s3 + $0x78] sm:$0xf]
    %v201 = vld [vmem:[%s3 + $0x7c] sm:$0xf]
    %v234 = vunpack.c.l.b16 %v170
    %v235 = vunpack.c.l.b16 %v171
    %v236 = vunpack.c.l.b16 %v172
    %v237 = vunpack.c.l.b16 %v173
    %v238 = vunpack.c.l.b16 %v174
    %v239 = vunpack.c.l.b16 %v175
    %v240 = vunpack.c.l.b16 %v176
    %v241 = vunpack.c.l.b16 %v177
    %v242 = vunpack.c.l.b16 %v178
    %v243 = vunpack.c.l.b16 %v179
    %v244 = vunpack.c.l.b16 %v180
    %v245 = vunpack.c.l.b16 %v181
    %v246 = vunpack.c.l.b16 %v182
    %v247 = vunpack.c.l.b16 %v183
    %v248 = vunpack.c.l.b16 %v184
    %v249 = vunpack.c.l.b16 %v185
    %v250 = vunpack.c.l.b16 %v186
    %v251 = vunpack.c.l.b16 %v187
    %v252 = vunpack.c.l.b16 %v188
    %v253 = vunpack.c.l.b16 %v189
    %v254 = vunpack.c.l.b16 %v190
    %v255 = vunpack.c.l.b16 %v191
    %v256 = vunpack.c.l.b16 %v192
    %v257 = vunpack.c.l.b16 %v193
    %v258 = vunpack.c.l.b16 %v194
    %v259 = vunpack.c.l.b16 %v195
    %v260 = vunpack.c.l.b16 %v196
    %v261 = vunpack.c.l.b16 %v197
    %v262 = vunpack.c.l.b16 %v198
    %v263 = vunpack.c.l.b16 %v199
    %v264 = vunpack.c.l.b16 %v200
    %v265 = vunpack.c.l.b16 %v201
    %v266 = vpack.c.b16 %v235, %v234
    %v267 = vpack.c.b16 %v237, %v236
    %v268 = vpack.c.b16 %v239, %v238
    %v269 = vpack.c.b16 %v241, %v240
    %v270 = vpack.c.b16 %v243, %v242
    %v271 = vpack.c.b16 %v245, %v244
    %v272 = vpack.c.b16 %v247, %v246
    %v273 = vpack.c.b16 %v249, %v248
    %v274 = vpack.c.b16 %v251, %v250
    %v275 = vpack.c.b16 %v253, %v252
    %v276 = vpack.c.b16 %v255, %v254
    %v277 = vpack.c.b16 %v257, %v256
    %v278 = vpack.c.b16 %v259, %v258
    %v279 = vpack.c.b16 %v261, %v260
    %v280 = vpack.c.b16 %v263, %v262
    %v281 = vpack.c.b16 %v265, %v264
    %298 = vmatprep.subr.bf16.mxu0 0
    %299 = vmatpush1.bf16.msra.mxu0 %v266
    %300 = vmatprep.subr.bf16.mxu0 0
    %301 = vmatpush1.bf16.msra.mxu0 %v267
    %302 = vmatprep.subr.bf16.mxu0 0
    %303 = vmatpush1.bf16.msra.mxu0 %v268
    %304 = vmatprep.subr.bf16.mxu0 0
    %305 = vmatpush1.bf16.msra.mxu0 %v269
    %306 = vmatprep.subr.bf16.mxu0 0
    %307 = vmatpush1.bf16.msra.mxu0 %v270
    %308 = vmatprep.subr.bf16.mxu0 0
    %309 = vmatpush1.bf16.msra.mxu0 %v271
    %310 = vmatprep.subr.bf16.mxu0 0
    %311 = vmatpush1.bf16.msra.mxu0 %v272
    %312 = vmatprep.subr.bf16.mxu0 0
    %313 = vmatpush1.bf16.msra.mxu0 %v273
    %314 = vmatprep.subr.bf16.mxu0 0
    %315 = vmatpush1.bf16.msra.mxu0 %v274
    %316 = vmatprep.subr.bf16.mxu0 0
    %317 = vmatpush1.bf16.msra.mxu0 %v275
    %318 = vmatprep.subr.bf16.mxu0 0
    %319 = vmatpush1.bf16.msra.mxu0 %v276
    %320 = vmatprep.subr.bf16.mxu0 0
    %321 = vmatpush1.bf16.msra.mxu0 %v277
    %322 = vmatprep.subr.bf16.mxu0 0
    %323 = vmatpush1.bf16.msra.mxu0 %v278
    %324 = vmatprep.subr.bf16.mxu0 0
    %325 = vmatpush1.bf16.msra.mxu0 %v279
    %326 = vmatprep.subr.bf16.mxu0 0
    %327 = vmatpush1.bf16.msra.mxu0 %v280
    %328 = vmatprep.subr.bf16.mxu0 0
    %329 = vmatpush1.bf16.msra.mxu0 %v281
    %330 = vmatprep.mubr.f32.mxu0 %v169
    %331 = vmatmul.mubr.f32.gmra.mrb[0].mxu0 %v168
    %v332 = vpop.f32.mrb[0].mxu0
    %v333 = vadd.f32 0.0, %v332
    %v334 = vpop.f32.mrb[0].mxu0
    %335 = vdwg.mxu0
    %v336 = vld [vmem:[%s4] sm:$0xff]
    %v338 = vunpack.c.l.b16 %v336
    %v339 = vunpack.c.h.b16 %v336
    %v340 = vpack.c.b16 %v338, %v338
    %v341 = vpack.c.b16 %v339, %v339
    %vm342 = vcmask 64512
    %v344 = vsel %vm342, %v333, 0
    %vm346 = vcmask 1043456
    %v348 = vsel %vm346, %v340, 0
    %v351 = vsel %vm346, %v341, 0
    %353 = vmatprep.subr.bf16.mxu0 %v351
    %354 = vmatpush1.bf16.msra.mxu0 %v348
    %355 = vmatprep.subr.bf16.mxu0 0
    %356 = vmatpush1.bf16.msra.mxu0 0
    %357 = vmatprep.subr.bf16.mxu0 0
    %358 = vmatpush1.bf16.msra.mxu0 0
    %359 = vmatprep.subr.bf16.mxu0 0
    %360 = vmatpush1.bf16.msra.mxu0 0
    %361 = vmatprep.subr.bf16.mxu0 0
    %362 = vmatpush1.bf16.msra.mxu0 0
    %363 = vmatprep.subr.bf16.mxu0 0
    %364 = vmatpush1.bf16.msra.mxu0 0
    %365 = vmatprep.subr.bf16.mxu0 0
    %366 = vmatpush1.bf16.msra.mxu0 0
    %367 = vmatprep.subr.bf16.mxu0 0
    %368 = vmatpush1.bf16.msra.mxu0 0
    %369 = vmatprep.subr.bf16.mxu0 0
    %370 = vmatpush1.bf16.msra.mxu0 0
    %371 = vmatprep.subr.bf16.mxu0 0
    %372 = vmatpush1.bf16.msra.mxu0 0
    %373 = vmatprep.subr.bf16.mxu0 0
    %374 = vmatpush1.bf16.msra.mxu0 0
    %375 = vmatprep.subr.bf16.mxu0 0
    %376 = vmatpush1.bf16.msra.mxu0 0
    %377 = vmatprep.subr.bf16.mxu0 0
    %378 = vmatpush1.bf16.msra.mxu0 0
    %379 = vmatprep.subr.bf16.mxu0 0
    %380 = vmatpush1.bf16.msra.mxu0 0
    %381 = vmatprep.subr.bf16.mxu0 0
    %382 = vmatpush1.bf16.msra.mxu0 0
    %383 = vmatprep.subr.bf16.mxu0 0
    %384 = vmatpush1.bf16.msra.mxu0 0
    %385 = vmatprep.mubr.f32.mxu0 0.0
    %386 = vmatmul.mubr.f32.gmra.mrb[0].mxu0 %v344
    %v387 = vpop.f32.mrb[0].mxu0
    %v388 = vadd.f32 0.0, %v387
    %v389 = vpop.f32.mrb[0].mxu0
    %v390 = vadd.f32 0.0, %v389
    %391 = vdwg.mxu0
    %v392 = vsub.f32 %v168, %v388
    %v393 = vsub.f32 %v169, %v390
    %v394 = vmul.f32 %v392, %v392
    %v395 = vmul.f32 %v393, %v393
    %396 = vmatprep.subr.bf16.mxu0 0
    %397 = vmatpush1.bf16.msra.mxu0 %v266
    %398 = vmatprep.subr.bf16.mxu0 0
    %399 = vmatpush1.bf16.msra.mxu0 %v267
    %400 = vmatprep.subr.bf16.mxu0 0
    %401 = vmatpush1.bf16.msra.mxu0 %v268
    %402 = vmatprep.subr.bf16.mxu0 0
    %403 = vmatpush1.bf16.msra.mxu0 %v269
    %404 = vmatprep.subr.bf16.mxu0 0
    %405 = vmatpush1.bf16.msra.mxu0 %v270
    %406 = vmatprep.subr.bf16.mxu0 0
    %407 = vmatpush1.bf16.msra.mxu0 %v271
    %408 = vmatprep.subr.bf16.mxu0 0
    %409 = vmatpush1.bf16.msra.mxu0 %v272
    %410 = vmatprep.subr.bf16.mxu0 0
    %411 = vmatpush1.bf16.msra.mxu0 %v273
    %412 = vmatprep.subr.bf16.mxu0 0
    %413 = vmatpush1.bf16.msra.mxu0 %v274
    %414 = vmatprep.subr.bf16.mxu0 0
    %415 = vmatpush1.bf16.msra.mxu0 %v275
    %416 = vmatprep.subr.bf16.mxu0 0
    %417 = vmatpush1.bf16.msra.mxu0 %v276
    %418 = vmatprep.subr.bf16.mxu0 0
    %419 = vmatpush1.bf16.msra.mxu0 %v277
    %420 = vmatprep.subr.bf16.mxu0 0
    %421 = vmatpush1.bf16.msra.mxu0 %v278
    %422 = vmatprep.subr.bf16.mxu0 0
    %423 = vmatpush1.bf16.msra.mxu0 %v279
    %424 = vmatprep.subr.bf16.mxu0 0
    %425 = vmatpush1.bf16.msra.mxu0 %v280
    %426 = vmatprep.subr.bf16.mxu0 0
    %427 = vmatpush1.bf16.msra.mxu0 %v281
    %428 = vmatprep.mubr.f32.mxu0 %v395
    %429 = vmatmul.mubr.f32.gmra.mrb[0].mxu0 %v394
    %v430 = vpop.f32.mrb[0].mxu0
    %v431 = vadd.f32 0.0, %v430
    %v432 = vpop.f32.mrb[0].mxu0
    %433 = vdwg.mxu0
    %v435 = vsel %vm342, %v431, 0
    %437 = vmatprep.subr.bf16.mxu0 %v351
    %438 = vmatpush1.bf16.msra.mxu0 %v348
    %439 = vmatprep.subr.bf16.mxu0 0
    %440 = vmatpush1.bf16.msra.mxu0 0
    %441 = vmatprep.subr.bf16.mxu0 0
    %442 = vmatpush1.bf16.msra.mxu0 0
    %443 = vmatprep.subr.bf16.mxu0 0
    %444 = vmatpush1.bf16.msra.mxu0 0
    %445 = vmatprep.subr.bf16.mxu0 0
    %446 = vmatpush1.bf16.msra.mxu0 0
    %447 = vmatprep.subr.bf16.mxu0 0
    %448 = vmatpush1.bf16.msra.mxu0 0
    %449 = vmatprep.subr.bf16.mxu0 0
    %450 = vmatpush1.bf16.msra.mxu0 0
    %451 = vmatprep.subr.bf16.mxu0 0
    %452 = vmatpush1.bf16.msra.mxu0 0
    %453 = vmatprep.subr.bf16.mxu0 0
    %454 = vmatpush1.bf16.msra.mxu0 0
    %455 = vmatprep.subr.bf16.mxu0 0
    %456 = vmatpush1.bf16.msra.mxu0 0
    %457 = vmatprep.subr.bf16.mxu0 0
    %458 = vmatpush1.bf16.msra.mxu0 0
    %459 = vmatprep.subr.bf16.mxu0 0
    %460 = vmatpush1.bf16.msra.mxu0 0
    %461 = vmatprep.subr.bf16.mxu0 0
    %462 = vmatpush1.bf16.msra.mxu0 0
    %463 = vmatprep.subr.bf16.mxu0 0
    %464 = vmatpush1.bf16.msra.mxu0 0
    %465 = vmatprep.subr.bf16.mxu0 0
    %466 = vmatpush1.bf16.msra.mxu0 0
    %467 = vmatprep.subr.bf16.mxu0 0
    %468 = vmatpush1.bf16.msra.mxu0 0
    %469 = vmatprep.mubr.f32.mxu0 0.0
    %470 = vmatmul.mubr.f32.gmra.mrb[0].mxu0 %v435
    %v471 = vpop.f32.mrb[0].mxu0
    %v472 = vadd.f32 1e-05, %v471
    %v473 = vpop.f32.mrb[0].mxu0
    %v474 = vadd.f32 1e-05, %v473
    %475 = vdwg.mxu0
    %v476 = vrsqrt.pop %v472
    %v477 = vrsqrt.pop %v474
    %v478 = vmul.f32 %v392, %v476
    %v479 = vmul.f32 %v393, %v477
    %v480 = vld [vmem:[%s5] sm:$0xff]
    %v481 = vld [vmem:[%s5 + $0x8] sm:$0xff]
    %v482 = vld [vmem:[%s5 + $0x10] sm:$0xff]
    %v483 = vld [vmem:[%s5 + $0x18] sm:$0xff]
    %v484 = vld [vmem:[%s5 + $0x20] sm:$0xff]
    %v485 = vld [vmem:[%s5 + $0x28] sm:$0xff]
    %v486 = vld [vmem:[%s5 + $0x30] sm:$0xff]
    %v487 = vld [vmem:[%s5 + $0x38] sm:$0xff]
    %v488 = vld [vmem:[%s5 + $0x40] sm:$0xff]
    %v489 = vld [vmem:[%s5 + $0x48] sm:$0xff]
    %v490 = vld [vmem:[%s5 + $0x50] sm:$0xff]
    %v491 = vld [vmem:[%s5 + $0x58] sm:$0xff]
    %v492 = vld [vmem:[%s5 + $0x60] sm:$0xff]
    %v493 = vld [vmem:[%s5 + $0x68] sm:$0xff]
    %v494 = vld [vmem:[%s5 + $0x70] sm:$0xff]
    %v495 = vld [vmem:[%s5 + $0x78] sm:$0xff]
    %v496 = vld [vmem:[%s5 + $0x80] sm:$0xff]
    %v497 = vld [vmem:[%s5 + $0x88] sm:$0xff]
    %v498 = vld [vmem:[%s5 + $0x90] sm:$0xff]
    %v499 = vld [vmem:[%s5 + $0x98] sm:$0xff]
    %v500 = vld [vmem:[%s5 + $0xa0] sm:$0xff]
    %v501 = vld [vmem:[%s5 + $0xa8] sm:$0xff]
    %v502 = vld [vmem:[%s5 + $0xb0] sm:$0xff]
    %v503 = vld [vmem:[%s5 + $0xb8] sm:$0xff]
    %v504 = vld [vmem:[%s5 + $0xc0] sm:$0xff]
    %v505 = vld [vmem:[%s5 + $0xc8] sm:$0xff]
    %v506 = vld [vmem:[%s5 + $0xd0] sm:$0xff]
    %v507 = vld [vmem:[%s5 + $0xd8] sm:$0xff]
    %v508 = vld [vmem:[%s5 + $0xe0] sm:$0xff]
    %v509 = vld [vmem:[%s5 + $0xe8] sm:$0xff]
    %v510 = vld [vmem:[%s5 + $0xf0] sm:$0xff]
    %v511 = vld [vmem:[%s5 + $0xf8] sm:$0xff]
    %v512 = vld [vmem:[%s6] sm:$0x1]
    %v514 = vlaneseq
    %v515 = vshrl.u32 %v514, 7
    %v516 = vsub.s32 0, %v515
    %v517 = vrot.slane %v512, %v516
    %519 = vmatprep.subr.mxu0 0.0
    %520 = vmatpush1.msra.mxu0 %v480
    %521 = vmatprep.subr.mxu0 0.0
    %522 = vmatpush1.msra.mxu0 %v481
    %523 = vmatprep.subr.mxu0 0.0
    %524 = vmatpush1.msra.mxu0 %v482
    %525 = vmatprep.subr.mxu0 0.0
    %526 = vmatpush1.msra.mxu0 %v483
    %527 = vmatprep.subr.mxu0 0.0
    %528 = vmatpush1.msra.mxu0 %v484
    %529 = vmatprep.subr.mxu0 0.0
    %530 = vmatpush1.msra.mxu0 %v485
    %531 = vmatprep.subr.mxu0 0.0
    %532 = vmatpush1.msra.mxu0 %v486
    %533 = vmatprep.subr.mxu0 0.0
    %534 = vmatpush1.msra.mxu0 %v487
    %535 = vmatprep.subr.mxu0 0.0
    %536 = vmatpush1.msra.mxu0 %v488
    %537 = vmatprep.subr.mxu0 0.0
    %538 = vmatpush1.msra.mxu0 %v489
    %539 = vmatprep.subr.mxu0 0.0
    %540 = vmatpush1.msra.mxu0 %v490
    %541 = vmatprep.subr.mxu0 0.0
    %542 = vmatpush1.msra.mxu0 %v491
    %543 = vmatprep.subr.mxu0 0.0
    %544 = vmatpush1.msra.mxu0 %v492
    %545 = vmatprep.subr.mxu0 0.0
    %546 = vmatpush1.msra.mxu0 %v493
    %547 = vmatprep.subr.mxu0 0.0
    %548 = vmatpush1.msra.mxu0 %v494
    %549 = vmatprep.subr.mxu0 0.0
    %550 = vmatpush1.msra.mxu0 %v495
    %551 = vmatprep.subr.mxu0 0.0
    %552 = vmatpush1.msra.mxu0 %v496
    %553 = vmatprep.subr.mxu0 0.0
    %554 = vmatpush1.msra.mxu0 %v497
    %555 = vmatprep.subr.mxu0 0.0
    %556 = vmatpush1.msra.mxu0 %v498
    %557 = vmatprep.subr.mxu0 0.0
    %558 = vmatpush1.msra.mxu0 %v499
    %559 = vmatprep.subr.mxu0 0.0
    %560 = vmatpush1.msra.mxu0 %v500
    %561 = vmatprep.subr.mxu0 0.0
    %562 = vmatpush1.msra.mxu0 %v501
    %563 = vmatprep.subr.mxu0 0.0
    %564 = vmatpush1.msra.mxu0 %v502
    %565 = vmatprep.subr.mxu0 0.0
    %566 = vmatpush1.msra.mxu0 %v503
    %567 = vmatprep.subr.mxu0 0.0
    %568 = vmatpush1.msra.mxu0 %v504
    %569 = vmatprep.subr.mxu0 0.0
    %570 = vmatpush1.msra.mxu0 %v505
    %571 = vmatprep.subr.mxu0 0.0
    %572 = vmatpush1.msra.mxu0 %v506
    %573 = vmatprep.subr.mxu0 0.0
    %574 = vmatpush1.msra.mxu0 %v507
    %575 = vmatprep.subr.mxu0 0.0
    %576 = vmatpush1.msra.mxu0 %v508
    %577 = vmatprep.subr.mxu0 0.0
    %578 = vmatpush1.msra.mxu0 %v509
    %579 = vmatprep.subr.mxu0 0.0
    %580 = vmatpush1.msra.mxu0 %v510
    %581 = vmatprep.subr.mxu0 0.0
    %582 = vmatpush1.msra.mxu0 %v511
    %583 = vmatprep.mubr.f32.mxu0 %v479
    %584 = vmatmul.mubr.f32.gmra.mrb[0].mxu0 %v478
    %v585 = vpop.f32.mrb[0].mxu0
    %v586 = vadd.f32 %v517, %v585
    %v587 = vpop.f32.mrb[0].mxu0
    %588 = vdwg.mxu0
    %v589 = vmul.f32 %v586, 0.5
    %v590 = vmul.f32 %v586, 0.70710677
    %v591 = verf.f32.pop %v590
    %v592 = vadd.f32 %v591, 1.0
    %v593 = vmul.f32 %v589, %v592
    %v594 = vmax.f32 %v593, -10.0
    %v595 = vmin.f32 %v594, 10.0
    %v596 = vmul.f32 %v595, %v60
    %v597 = vmul.f32 %v596, %v42
    %v598 = vadd.f32 %v597, %v33
    %vm599 = vcmp.ne.f32.partialorder %v598, %v598
    %v600 = vsel %vm599, 0.0, %v598
    %vm601 = vcmp.gt.f32.partialorder %v600, 3.4028235e+38
    %v602 = vsel %vm601, 0.0, %v600
    %vm603 = vcmp.lt.f32.partialorder %v602, -3.4028235e+38
    %v604 = vsel %vm603, 0.0, %v602
    %605 = vst.msk [vmem:[#allocation2] sm:$0xff] %vm29, %v604
    // Predicated region
    $region30: #{tiny_time_mixer_adapter_forward.1} parent=1 // pred_check
      _
    $region31: #{tiny_time_mixer_adapter_forward.1} parent=1 // pred_check_branch
      %607 = sbr.rel (0) target = $region33
    $region32: #{tiny_time_mixer_adapter_forward.1} parent=1 // pred_region
      %s609 = ssub.s32 128, 128
      %610 = vsyncadd [#allocation3], %s609
      %s612 = sshll.u32 [#allocation2], 4
      %s613 = int_to_ptr.vmem [resolvable:$true] %s612
      %615 = dma.vmem_to_hbm [thread:$0]  %s613, 128, %s7, [#allocation3]
    $region33: #{tiny_time_mixer_adapter_forward.1} parent=1 // pred_fallthru
      _
    // Predicated region
    $region34: #{tiny_time_mixer_adapter_forward.1} parent=1 // pred_check
      _
    $region35: #{tiny_time_mixer_adapter_forward.1} parent=1 // pred_check_branch
      %617 = sbr.rel (0) target = $region37
    $region36: #{tiny_time_mixer_adapter_forward.1} parent=1 // pred_region
      %618 = dma.done [#allocation3], 128
    $region37: #{tiny_time_mixer_adapter_forward.1} parent=1 // pred_fallthru
      _
    %619 = vsyncpa [#allocation3], 1

</llo_original>
